<compile_context>
chip_gen: v6e
topology: v6e:2x2x1
jax: 0.10.0
libtpu: 0.0.40
codegen_flags: <defaults>
</compile_context>

<pallas_src>
import functools

import jax
import jax.numpy as jnp
from jax.experimental import pallas as pl
from jax.experimental.pallas import tpu as pltpu


def _round_up(v, m):
    return (v + m - 1) // m * m


def _tile_plan(N, L, tm, tk):
    """Clamp tiles to the (padded) problem; pad rows / cols independently."""
    tm = max(128, min(_round_up(tm, 128), _round_up(N, 128)))
    tk = max(128, min(_round_up(tk, 128), _round_up(N, 128)))
    # v7x megacore balance: nudge the parallel extent (L * row_blocks) to be
    # even so both TensorCores get equal work (no effect on 1-TC v5e/v6e).
    if tm % 256 == 0 and (L * (_round_up(N, tm) // tm)) % 2 == 1:
        tm //= 2
    return tm, tk, _round_up(N, tm), _round_up(N, tk)


def prepare_adjacency(edge_stack, *, tm=1024, tk=1024, adj_dtype=jnp.int8):
    """Pad + cast the label-wise adjacencies once (hoisted out of hot path).

    The adjacency is static across GNN layers / training iterations, so doing
    this O(L*N^2) pad/cast per call would cost about as much HBM time as the
    kernel itself.  NOTE: narrow dtypes (int8 / bf16 / fp8) are exact only for
    binary 0/1 adjacencies; pass adj_dtype=jnp.float32 for weighted A.
    """
    L, N, N2 = edge_stack.shape
    assert N2 == N
    tm, tk, Nr, Nc = _tile_plan(N, L, tm, tk)
    return jnp.zeros((L, Nr, Nc), adj_dtype).at[:, :N, :N].set(
        edge_stack.astype(adj_dtype)
    )


def _dis_spmm_kernel(a_ref, xhi_ref, xlo_ref, o_ref, acc_ref, *, tk, x_resident):
    # a_ref  : (tm, tk)        int8 adjacency tile (label l, row-block i, k-block k)
    # xhi_ref: (Nc or tk, Fp)  bf16 high part of x
    # xlo_ref: (Nc or tk, Fp)  bf16 low (residual) part of x
    # o_ref  : (tm, Fp)        output slab: row-block i, feature-slab l
    # acc_ref: (tm, Fp)        f32 accumulator, resident across the k axis
    k = pl.program_id(2)

    @pl.when(k == 0)
    def _():
        acc_ref[...] = jnp.zeros_like(acc_ref)

    # int8 -> bf16 upconvert (VPU; hidden under the A DMA), then native
    # bf16 x bf16 MXU matmuls accumulating in f32.
    a = a_ref[...].astype(jnp.bfloat16)

    if x_resident:
        off = pl.multiple_of(k * tk, 128)
        x_hi = xhi_ref[pl.ds(off, tk), :]
        x_lo = xlo_ref[pl.ds(off, tk), :]
    else:
        x_hi = xhi_ref[...]
        x_lo = xlo_ref[...]

    acc_ref[...] += (
        jnp.dot(a, x_hi, preferred_element_type=jnp.float32)
        + jnp.dot(a, x_lo, preferred_element_type=jnp.float32)
    )

    @pl.when(k == pl.num_programs(2) - 1)
    def _():
        o_ref[...] = acc_ref[...].astype(o_ref.dtype)


def dis_conv(x, edge_stack, *, tm=1024, tk=1024, adj_dtype=jnp.int8,
             prepared_adj=None):
    """DISConv forward.

    x:            (N, F) float32 node features.
    edge_stack:   (L, N, N) dense label-wise adjacencies (one per edge label).
    prepared_adj: optional output of prepare_adjacency() built with the SAME
                  tm/tk/adj_dtype (reuse across calls; adjacency is static).
    Returns (N, (L + 1) * F) = [A_0 @ x | ... | A_{L-1} @ x | x].
    """
    L, N, N2 = edge_stack.shape
    assert N2 == N and x.shape[0] == N
    F = x.shape[1]
    Fp = _round_up(F, 128)

    tm_u, tk_u = tm, tk
    tm, tk, Nr, Nc = _tile_plan(N, L, tm_u, tk_u)

    if prepared_adj is None:
        a_p = prepare_adjacency(edge_stack, tm=tm_u, tk=tk_u, adj_dtype=adj_dtype)
    else:
        a_p = prepared_adj
        assert a_p.shape == (L, Nr, Nc) and a_p.dtype == jnp.dtype(adj_dtype), (
            a_p.shape, a_p.dtype)

    # bf16 hi/lo split of x: A @ x == A @ x_hi + A @ x_lo to ~f32 accuracy,
    # using only native bf16 MXU passes.  Padded rows/cols are zero => exact.
    x_f32 = jnp.zeros((Nc, Fp), jnp.float32).at[:N, :F].set(x.astype(jnp.float32))
    x_hi = x_f32.astype(jnp.bfloat16)
    x_lo = (x_f32 - x_hi.astype(jnp.float32)).astype(jnp.bfloat16)

    # Keep the whole x resident in VMEM when it fits (constant block index =>
    # fetched once, never re-streamed); otherwise fall back to K-tiled blocks.
    x_resident = Nc * Fp <= (2 << 20)
    if x_resident:
        x_spec = pl.BlockSpec((Nc, Fp), lambda l, i, k: (0, 0))
    else:
        x_spec = pl.BlockSpec((tk, Fp), lambda l, i, k: (k, 0))

    # VMEM budget: double-buffered A / x / out tiles + f32 accumulator, with
    # headroom below v7x's 64 MiB physical VMEM per TensorCore.
    x_rows = Nc if x_resident else tk
    vmem_need = (
        2 * tm * tk * jnp.dtype(adj_dtype).itemsize  # A tiles (2 buffers)
        + 2 * 2 * x_rows * Fp * 2                    # x hi+lo bf16 (2 buffers)
        + 2 * tm * Fp * 4                            # output tiles (2 buffers)
        + tm * Fp * 4                                # accumulator scratch
    )
    vmem_limit = int(min(max(int(1.25 * vmem_need), 32 << 20), 56 << 20))

    kernel = functools.partial(_dis_spmm_kernel, tk=tk, x_resident=x_resident)

    h = pl.pallas_call(
        kernel,
        out_shape=jax.ShapeDtypeStruct((Nr, L * Fp), x.dtype),
        grid_spec=pltpu.PrefetchScalarGridSpec(
            num_scalar_prefetch=0,
            grid=(L, Nr // tm, Nc // tk),
            in_specs=[
                # adjacency tile for (label l, row-block i, k-block k);
                # Squeezed label dim => kernel sees a (tm, tk) ref directly.
                pl.BlockSpec((pl.Squeezed(), tm, tk), lambda l, i, k: (l, i, k)),
                x_spec,   # x_hi
                x_spec,   # x_lo
            ],
            # lane-dense, pre-concatenated output layout: slab l, row-block i.
            out_specs=pl.BlockSpec((tm, Fp), lambda l, i, k: (i, l)),
            scratch_shapes=[pltpu.VMEM((tm, Fp), jnp.float32)],
        ),
        compiler_params=pltpu.CompilerParams(
            dimension_semantics=("parallel", "parallel", "arbitrary"),
            vmem_limit_bytes=vmem_limit,
        ),
    )(a_p, x_hi, x_lo)

    # Strip row/feature padding, then append the trailing x slab (O(N*F)).
    h = h[:N].reshape(N, L, Fp)[:, :, :F].reshape(N, L * F)
    return jnp.concatenate([h, x], axis=1)


if __name__ == "__main__":
    key = jax.random.PRNGKey(0)
    k_x, k_a = jax.random.split(key)

    N = 300   # number of nodes (exercises row padding 300 -> 384)
    F = 72    # feature dim (exercises lane padding 72 -> 128)
    L = 3     # number of edge labels (len(edge_label_wise))

    x = jax.random.normal(k_x, (N, F), dtype=jnp.float32)

    # Deterministic synthetic label-wise adjacencies (binary 0/1 -> exact in int8).
    dense = jax.random.uniform(k_a, (L, N, N), dtype=jnp.float32)
    edge_stack = (dense > 0.7).astype(jnp.float32)

    # Reference (pure JAX, full-precision matmul) matching the torch module.
    ref = jnp.concatenate(
        [jnp.dot(edge_stack[l], x, precision=jax.lax.Precision.HIGHEST)
         for l in range(L)] + [x],
        axis=1,
    )

    # Small tiles: exercises k-accumulation, row tiling, and the hoisted
    # (once-per-graph) adjacency pad/cast.
    a_p = prepare_adjacency(edge_stack, tm=128, tk=128)
    out = dis_conv(x, edge_stack, tm=128, tk=128, prepared_adj=a_p)
    out = jax.block_until_ready(out)
    assert out.shape == (N, (L + 1) * F), out.shape
    assert jnp.allclose(out, ref, atol=1e-3, rtol=1e-3), float(
        jnp.max(jnp.abs(out - ref)))

    # Default (large-tile, clamped) path: single k block, resident x.
    out2 = jax.block_until_ready(dis_conv(x, edge_stack))
    assert jnp.allclose(out2, ref, atol=1e-3, rtol=1e-3), float(
        jnp.max(jnp.abs(out2 - ref)))

    print("KERNEL_OK")
</pallas_src>

<mosaic_0001>
module attributes {stable_mosaic.version = 11 : i64} {
  func.func @_dis_spmm_kernel(%arg0: i32, %arg1: i32, %arg2: i32, %arg3: memref<1x128x128xi8, #tpu.memory_space<vmem>>, %arg4: memref<384x128xbf16, #tpu.memory_space<vmem>>, %arg5: memref<384x128xbf16, #tpu.memory_space<vmem>>, %arg6: memref<128x128xf32, #tpu.memory_space<vmem>>, %arg7: memref<128x128xf32, #tpu.memory_space<vmem>>) attributes {dimension_semantics = [#tpu.dimension_semantics<parallel>, #tpu.dimension_semantics<parallel>, #tpu.dimension_semantics<arbitrary>], iteration_bounds = array<i64: 3, 3, 3>, scalar_prefetch = 0 : i64, scratch_operands = 1 : i64, tpu.core_type = #tpu.core_type<tc>, window_params = [{transform_indices = @transform_0, window_bounds = array<i64: 1, 128, 128>}, {pipeline_mode = #tpu.pipeline_mode<synchronous>, transform_indices = @transform_1, window_bounds = array<i64: 384, 128>}, {pipeline_mode = #tpu.pipeline_mode<synchronous>, transform_indices = @transform_2, window_bounds = array<i64: 384, 128>}, {transform_indices = @transform_3, window_bounds = array<i64: 128, 128>}]} {
    %c0_i32 = arith.constant 0 : i32
    %0 = arith.cmpi eq, %arg2, %c0_i32 : i32
    %1 = arith.extui %0 : i1 to i32
    %c0_i32_0 = arith.constant 0 : i32
    %2 = arith.cmpi ne, %1, %c0_i32_0 : i32
    scf.if %2 {
      %cst_11 = arith.constant 0.000000e+00 : f32
      %21 = vector.broadcast %cst_11 : f32 to vector<128x128xf32>
      %c0_12 = arith.constant 0 : index
      %c0_13 = arith.constant 0 : index
      %22 = vector.load %arg7[%c0_12, %c0_13] : memref<128x128xf32, #tpu.memory_space<vmem>>, vector<128x128xf32>
      tpu.vector_store %arg7[%c0_12, %c0_13], %21 {strides = array<i32>} : memref<128x128xf32, #tpu.memory_space<vmem>>, vector<128x128xf32>,
    } else {
    }
    %c0 = arith.constant 0 : index
    %c0_1 = arith.constant 0 : index
    %c0_2 = arith.constant 0 : index
    %3 = vector.load %arg3[%c0, %c0_1, %c0_2] : memref<1x128x128xi8, #tpu.memory_space<vmem>>, vector<1x128x128xi8>
    %4 = vector.shape_cast %3 : vector<1x128x128xi8> to vector<128x128xi8>
    %5 = arith.sitofp %4 : vector<128x128xi8> to vector<128x128xbf16>
    %c128_i32 = arith.constant 128 : i32
    %6 = arith.muli %arg2, %c128_i32 : i32
    %7 = tpu.assume_multiple %6, 128 : i32
    %8 = arith.index_cast %7 : i32 to index
    %c0_3 = arith.constant 0 : index
    %9 = vector.load %arg4[%8, %c0_3] : memref<384x128xbf16, #tpu.memory_space<vmem>>, vector<128x128xbf16>
    %10 = arith.index_cast %7 : i32 to index
    %c0_4 = arith.constant 0 : index
    %11 = vector.load %arg5[%10, %c0_4] : memref<384x128xbf16, #tpu.memory_space<vmem>>, vector<128x128xbf16>
    %c0_5 = arith.constant 0 : index
    %c0_6 = arith.constant 0 : index
    %12 = vector.load %arg7[%c0_5, %c0_6] : memref<128x128xf32, #tpu.memory_space<vmem>>, vector<128x128xf32>
    %cst = arith.constant dense<0.000000e+00> : vector<128x128xf32>
    %13 = tpu.matmul %5, %9, %cst {dimension_numbers = #tpu.dot_dimension_numbers<[1], [0], [0], [1], [0, 0, 1, 1], [], []>} : vector<128x128xbf16>, vector<128x128xbf16>, vector<128x128xf32> -> vector<128x128xf32>
    %cst_7 = arith.constant dense<0.000000e+00> : vector<128x128xf32>
    %14 = tpu.matmul %5, %11, %cst_7 {dimension_numbers = #tpu.dot_dimension_numbers<[1], [0], [0], [1], [0, 0, 1, 1], [], []>} : vector<128x128xbf16>, vector<128x128xbf16>, vector<128x128xf32> -> vector<128x128xf32>
    %15 = arith.addf %13, %14 : vector<128x128xf32>
    %16 = arith.addf %12, %15 : vector<128x128xf32>
    %c0_8 = arith.constant 0 : index
    %c0_9 = arith.constant 0 : index
    %17 = vector.load %arg7[%c0_8, %c0_9] : memref<128x128xf32, #tpu.memory_space<vmem>>, vector<128x128xf32>
    tpu.vector_store %arg7[%c0_8, %c0_9], %16 {strides = array<i32>} : memref<128x128xf32, #tpu.memory_space<vmem>>, vector<128x128xf32>,
    %c2_i32 = arith.constant 2 : i32
    %18 = arith.cmpi eq, %arg2, %c2_i32 : i32
    %19 = arith.extui %18 : i1 to i32
    %c0_i32_10 = arith.constant 0 : i32
    %20 = arith.cmpi ne, %19, %c0_i32_10 : i32
    scf.if %20 {
      %c0_11 = arith.constant 0 : index
      %c0_12 = arith.constant 0 : index
      %21 = vector.load %arg7[%c0_11, %c0_12] : memref<128x128xf32, #tpu.memory_space<vmem>>, vector<128x128xf32>
      %c0_13 = arith.constant 0 : index
      %c0_14 = arith.constant 0 : index
      %22 = vector.load %arg6[%c0_13, %c0_14] : memref<128x128xf32, #tpu.memory_space<vmem>>, vector<128x128xf32>
      tpu.vector_store %arg6[%c0_13, %c0_14], %21 {strides = array<i32>} : memref<128x128xf32, #tpu.memory_space<vmem>>, vector<128x128xf32>,
    } else {
    }
    return
  }
  func.func @transform_0(%arg0: i32, %arg1: i32, %arg2: i32) -> (i32, i32, i32) {
    %c0_i32 = arith.constant 0 : i32
    return %arg0, %arg1, %arg2 : i32, i32, i32
  }
  func.func @transform_1(%arg0: i32, %arg1: i32, %arg2: i32) -> (i32, i32) {
    %c0_i32 = arith.constant 0 : i32
    %c0_i32_0 = arith.constant 0 : i32
    %c0_i32_1 = arith.constant 0 : i32
    return %c0_i32, %c0_i32_0 : i32, i32
  }
  func.func @transform_2(%arg0: i32, %arg1: i32, %arg2: i32) -> (i32, i32) {
    %c0_i32 = arith.constant 0 : i32
    %c0_i32_0 = arith.constant 0 : i32
    %c0_i32_1 = arith.constant 0 : i32
    return %c0_i32, %c0_i32_0 : i32, i32
  }
  func.func @transform_3(%arg0: i32, %arg1: i32, %arg2: i32) -> (i32, i32) {
    %c0_i32 = arith.constant 0 : i32
    return %arg1, %arg0 : i32, i32
  }
}

</mosaic_0001>

<llo_original>
// kernel: tpu_custom_call.1
$region0: #{tpu_custom_call.1}
  #allocation0 [shape = 'u32[]', space=smem, size = 0x4, offset = 0x4, fixed_abs, tag = 'smem constant byte address 0x4 - core index']
  #allocation1 [shape = 'u32[144,128]{1,0:T(1,128)}', space=vmem, size = 0x12000, scoped, tag = 'internal scratch']
  #allocation2 [shape = 'f32[128,128]{1,0:T(8,128)}', space=vmem, size = 0x10000, scoped, tag = 'scratch operand']
  %s0 = inlined_call_operand.hbm [shape: s8[3,384,384], index: 0, kind: input, shape index: {}]
  %s1 = inlined_call_operand.hbm [shape: bf16[384,128], index: 1, kind: input, shape index: {}]
  %s2 = inlined_call_operand.hbm [shape: bf16[384,128], index: 2, kind: input, shape index: {}]
  %s3 = inlined_call_operand.hbm [shape: f32[384,384], index: 3, kind: output, shape index: {}]
  %s4 = sld [smem:[#allocation0]]
  $region65: #{tpu_custom_call.1} parent=0
    _
  %s6 = ssub.s32 1, %s4
  %s7 = scalar_select 0, %s6, %s4
  $region1: #{tpu_custom_call.1} parent=0
    #allocation3 [shape = 'u8[32768]{0}', space=vmem, size = 0x8000, scoped, tag = 'input window, operand 0']
    #allocation4 [shape = 's32[2]{0}', space=sflag, size = 0x8, scoped, tag = 'scoped memory for tpu_custom_call.1']
    #allocation5 [shape = 's32[2]{0}', space=sflag, size = 0x8, scoped, tag = 'scoped memory for tpu_custom_call.1']
    #allocation6 [shape = 'u8[98304]{0}', space=vmem, size = 0x18000, scoped, tag = 'input window, operand 1, single buffered']
    #allocation7 [shape = 's32[1]{0}', space=sflag, size = 0x4, scoped, tag = 'scoped memory for tpu_custom_call.1']
    #allocation8 [shape = 'u8[98304]{0}', space=vmem, size = 0x18000, scoped, tag = 'input window, operand 2, single buffered']
    #allocation9 [shape = 'u8[131072]{0}', space=vmem, size = 0x20000, scoped, tag = 'output window, operand 0']
    %8 = vsyncpa [#allocation4], 0
    %s9 = scalar_lea.sflag [#allocation4], 1
    %10 = vsyncpa %s9, 0
    %11 = vsyncpa [#allocation7], 0
    %12 = vsyncpa [#allocation5], 0
    %s13 = scalar_lea.sflag [#allocation5], 1
    %14 = vsyncpa %s13, 0
    loop: start=0, step=1, limit=29
    $region2: #{tpu_custom_call.1} parent=1 // loop_pre_header
      _
    $region3: #{tpu_custom_call.1} parent=1 // loop_header
      %s16 = sphi 0, %s20
      %p17 = scmp.ge.s32.totalorder %s16, 29
      %s23 = sphi 0, %s42
      %s24 = sphi 0, %s38
      %s25 = sphi 0, %s34
      %s26 = sphi 0, %s23
      %s27 = sphi 0, %s24
      %s28 = sphi 0, %s25
      %s29 = sphi 0, %s26
      %s30 = sphi 0, %s27
      %s31 = sphi 0, %s28
      %s49 = sphi 0, %s51
      %s52 = sphi 0, %s49
      %s53 = sphi 0, %s52
      %s69 = sphi 0, %s53
      %s73 = sphi 0, %s73
      %s75 = sphi 0, %s73
      %s76 = sphi 0, %s75
      %s90 = sphi 0, %s76
      %s94 = sphi 0, %s94
      %s96 = sphi 0, %s94
      %s97 = sphi 0, %s96
      %s111 = sphi 0, %s97
      %s119 = sphi 0, %s121
      %s122 = sphi 0, %s119
      %s123 = sphi 0, %s122
      %s139 = sphi 0, %s123
    $region4: #{tpu_custom_call.1} parent=1 // loop_header_branch
      %19 = sbr.rel (%p17) target = $region8
    $region5: #{tpu_custom_call.1} parent=1 // loop_body
      %s21 = ssub.s32 %s16, 1
      %s22 = ssub.s32 %s16, 2
      %s32 = sadd.s32 1, %s25
      %p33 = scmp.ge.s32.totalorder %s32, 3
      %s34 = scalar_select %p33, 0, %s32
      %s35 = sadd.s32 1, %s24
      %s36 = scalar_select %p33, %s35, %s24
      %p37 = scmp.ge.s32.totalorder %s36, 3
      %s38 = scalar_select %p37, 0, %s36
      %s39 = sadd.s32 1, %s23
      %s40 = scalar_select %p37, %s39, %s23
      %p41 = scmp.ge.s32.totalorder %s40, 3
      %s42 = scalar_select %p41, 0, %s40
      %s43 = ssub.s32 %s23, %s42
      %s44 = ssub.s32 %s24, %s38
      %s45 = sor.u32 %s43, %s44
      %s46 = ssub.s32 %s25, %s34
      %s47 = sor.u32 %s45, %s46
      %p48 = scmp.eq.s32.totalorder %s47, 0
      %s50 = sadd.s32 %s49, 1
      %s51 = scalar_select %p48, %s49, %s50
      %p54 = pneg %p48
      %p55 = scmp.eq.s32.totalorder %s16, 26
      %p56 = por %p54, %p55
      %p57 = scmp.ne.s32.totalorder %s49, %s52
      %p58 = scmp.eq.s32.totalorder %s16, 0
      %p59 = por %p57, %p58
      %p60 = scmp.ne.s32.totalorder %s49, %s52
      %p61 = scmp.eq.s32.totalorder %s21, 26
      %p62 = por %p60, %p61
      %p63 = scmp.ne.s32.totalorder %s52, %s53
      %p64 = scmp.eq.s32.totalorder %s21, 0
      %p65 = por %p63, %p64
      %p66 = scmp.ne.s32.totalorder %s52, %s53
      %p67 = scmp.eq.s32.totalorder %s22, 26
      %p68 = por %p66, %p67
      %p70 = scmp.ne.s32.totalorder %s53, %s69
      %p71 = scmp.eq.s32.totalorder %s22, 0
      %p72 = por %p70, %p71
      %s74 = sadd.s32 %s73, 1
      %p77 = scmp.eq.s32.totalorder %s16, 26
      %p78 = scmp.ne.s32.totalorder %s73, %s75
      %p79 = scmp.eq.s32.totalorder %s16, 0
      %p80 = por %p78, %p79
      %p81 = scmp.ne.s32.totalorder %s73, %s75
      %p82 = scmp.eq.s32.totalorder %s21, 26
      %p83 = por %p81, %p82
      %p84 = scmp.ne.s32.totalorder %s75, %s76
      %p85 = scmp.eq.s32.totalorder %s21, 0
      %p86 = por %p84, %p85
      %p87 = scmp.ne.s32.totalorder %s75, %s76
      %p88 = scmp.eq.s32.totalorder %s22, 26
      %p89 = por %p87, %p88
      %p91 = scmp.ne.s32.totalorder %s76, %s90
      %p92 = scmp.eq.s32.totalorder %s22, 0
      %p93 = por %p91, %p92
      %s95 = sadd.s32 %s94, 1
      %p98 = scmp.eq.s32.totalorder %s16, 26
      %p99 = scmp.ne.s32.totalorder %s94, %s96
      %p100 = scmp.eq.s32.totalorder %s16, 0
      %p101 = por %p99, %p100
      %p102 = scmp.ne.s32.totalorder %s94, %s96
      %p103 = scmp.eq.s32.totalorder %s21, 26
      %p104 = por %p102, %p103
      %p105 = scmp.ne.s32.totalorder %s96, %s97
      %p106 = scmp.eq.s32.totalorder %s21, 0
      %p107 = por %p105, %p106
      %p108 = scmp.ne.s32.totalorder %s96, %s97
      %p109 = scmp.eq.s32.totalorder %s22, 26
      %p110 = por %p108, %p109
      %p112 = scmp.ne.s32.totalorder %s97, %s111
      %p113 = scmp.eq.s32.totalorder %s22, 0
      %p114 = por %p112, %p113
      %s115 = ssub.s32 %s24, %s38
      %s116 = ssub.s32 %s23, %s42
      %s117 = sor.u32 %s115, %s116
      %p118 = scmp.eq.s32.totalorder %s117, 0
      %s120 = sadd.s32 %s119, 1
      %s121 = scalar_select %p118, %s119, %s120
      %p124 = pneg %p118
      %p125 = scmp.eq.s32.totalorder %s16, 26
      %p126 = por %p124, %p125
      %p127 = scmp.ne.s32.totalorder %s119, %s122
      %p128 = scmp.eq.s32.totalorder %s16, 0
      %p129 = por %p127, %p128
      %p130 = scmp.ne.s32.totalorder %s119, %s122
      %p131 = scmp.eq.s32.totalorder %s21, 26
      %p132 = por %p130, %p131
      %p133 = scmp.ne.s32.totalorder %s122, %s123
      %p134 = scmp.eq.s32.totalorder %s21, 0
      %p135 = por %p133, %p134
      %p136 = scmp.ne.s32.totalorder %s122, %s123
      %p137 = scmp.eq.s32.totalorder %s22, 26
      %p138 = por %p136, %p137
      %p140 = scmp.ne.s32.totalorder %s123, %s139
      %p141 = scmp.eq.s32.totalorder %s22, 0
      %p142 = por %p140, %p141
      %p143 = scmp.le.s32.totalorder 1, %s16
      %p144 = scmp.lt.s32.totalorder %s16, 28
      %p145 = pnand %p143, %p144
      %p146 = pneg %p145
      // Predicated region
      $region9: #{tpu_custom_call.1} parent=5 // pred_check
        _
      $region10: #{tpu_custom_call.1} parent=5 // pred_check_branch
        %148 = sbr.rel (%p145) target = $region12
      $region11: #{tpu_custom_call.1} parent=5 // pred_region
        %s149 = ssub.s32 %s16, 1
        // Predicated region
        $region13: #{tpu_custom_call.1} parent=11 // pred_check
          %p150 = pneg %p86
        $region14: #{tpu_custom_call.1} parent=11 // pred_check_branch
          %152 = sbr.rel (%p150) target = $region16
        $region15: #{tpu_custom_call.1} parent=11 // pred_region
          %s154 = ssub.s32 3072, 3072
          %155 = vsyncadd [#allocation7], %s154
          %s156 = sshll.u32 [#allocation6], 4
          %s157 = int_to_ptr.vmem [resolvable:$true] %s156
          %162 = dma.hbm_to_vmem [thread:$0]  %s1, 3072, %s157, [#allocation7], 64, 64, 4
        $region16: #{tpu_custom_call.1} parent=11 // pred_fallthru
          _
        // Predicated region
        $region17: #{tpu_custom_call.1} parent=11 // pred_check
          %p163 = pneg %p107
        $region18: #{tpu_custom_call.1} parent=11 // pred_check_branch
          %165 = sbr.rel (%p163) target = $region20
        $region19: #{tpu_custom_call.1} parent=11 // pred_region
          %s167 = ssub.s32 3072, 3072
          %168 = vsyncadd [#allocation7], %s167
          %s169 = sshll.u32 [#allocation8], 4
          %s170 = int_to_ptr.vmem [resolvable:$true] %s169
          %175 = dma.hbm_to_vmem [thread:$0]  %s2, 3072, %s170, [#allocation7], 64, 64, 4
        $region20: #{tpu_custom_call.1} parent=11 // pred_fallthru
          _
      $region12: #{tpu_custom_call.1} parent=5 // pred_fallthru
        _
      %p176 = scmp.lt.s32.totalorder %s16, 27
      // Predicated region
      $region21: #{tpu_custom_call.1} parent=5 // pred_check
        %p177 = pneg %p176
      $region22: #{tpu_custom_call.1} parent=5 // pred_check_branch
        %179 = sbr.rel (%p177) target = $region24
      $region23: #{tpu_custom_call.1} parent=5 // pred_region
        // Predicated region
        $region25: #{tpu_custom_call.1} parent=23 // pred_check
          %p180 = pneg %p59
        $region26: #{tpu_custom_call.1} parent=23 // pred_check_branch
          %182 = sbr.rel (%p180) target = $region28
        $region27: #{tpu_custom_call.1} parent=23 // pred_region
          %s183 = sand.u32 %s49, 1
          %s184 = scalar_lea.sflag [#allocation4], %s183
          %s185 = sand.u32 %s49, 1
          %s186 = smul.addr %s185, 32
          %s187 = scalar_lea.vmem [#allocation3], %s186
          %s188 = smul.u32 4, %s24
          %s190 = ssub.s32 512, 512
          %191 = vsyncadd %s184, %s190
          %s192 = smul.addr %s188, 3
          %s193 = sadd.s32 %s25, %s192
          %s194 = smul.addr %s23, 36
          %s195 = sadd.s32 %s193, %s194
          %s196 = smul.addr %s195, 128
          %s197 = scalar_lea.hbm %s0, %s196
          %s198 = sshll.u32 %s187, 4
          %s199 = int_to_ptr.vmem [resolvable:$true] %s198
          %204 = dma.hbm_to_vmem [thread:$0]  %s197, 512, %s199, %s184, 384, 128, 8
        $region28: #{tpu_custom_call.1} parent=23 // pred_fallthru
          _
      $region24: #{tpu_custom_call.1} parent=5 // pred_fallthru
        _
      %p205 = scmp.le.s32.totalorder 1, %s16
      %p206 = scmp.lt.s32.totalorder %s16, 28
      %p207 = pnand %p205, %p206
      %p208 = pneg %p207
      // Predicated region
      $region29: #{tpu_custom_call.1} parent=5 // pred_check
        _
      $region30: #{tpu_custom_call.1} parent=5 // pred_check_branch
        %210 = sbr.rel (%p207) target = $region32
      $region31: #{tpu_custom_call.1} parent=5 // pred_region
        %s211 = ssub.s32 %s16, 1
        %s212 = sand.u32 %s52, 1
        %s213 = scalar_lea.sflag [#allocation4], %s212
        %s214 = sand.u32 %s52, 1
        %s215 = smul.addr %s214, 32
        %s216 = scalar_lea.vmem [#allocation3], %s215
        // Predicated region
        $region33: #{tpu_custom_call.1} parent=31 // pred_check
          %p217 = pneg %p65
        $region34: #{tpu_custom_call.1} parent=31 // pred_check_branch
          %219 = sbr.rel (%p217) target = $region36
        $region35: #{tpu_custom_call.1} parent=31 // pred_region
          %220 = dma.done %s213, 512
        $region36: #{tpu_custom_call.1} parent=31 // pred_fallthru
          _
        // Predicated region
        $region37: #{tpu_custom_call.1} parent=31 // pred_check
          %p221 = pneg %p86
        $region38: #{tpu_custom_call.1} parent=31 // pred_check_branch
          %223 = sbr.rel (%p221) target = $region40
        $region39: #{tpu_custom_call.1} parent=31 // pred_region
          %224 = dma.done [#allocation7], 3072
        $region40: #{tpu_custom_call.1} parent=31 // pred_fallthru
          _
        // Predicated region
        $region41: #{tpu_custom_call.1} parent=31 // pred_check
          %p225 = pneg %p107
        $region42: #{tpu_custom_call.1} parent=31 // pred_check_branch
          %227 = sbr.rel (%p225) target = $region44
        $region43: #{tpu_custom_call.1} parent=31 // pred_region
          %228 = dma.done [#allocation7], 3072
        $region44: #{tpu_custom_call.1} parent=31 // pred_fallthru
          _
        %s229 = sand.u32 %s52, 1
        %s230 = scalar_lea.sflag [#allocation4], %s229
        %s231 = sand.u32 %s52, 1
        %s232 = smul.addr %s231, 32
        %s233 = scalar_lea.vmem [#allocation3], %s232
        %p234 = pneg %p65
        %p235 = pneg %p62
        %p236 = pneg %p86
        %p237 = pneg %p83
        %p238 = pneg %p107
        %p239 = pneg %p104
        %p240 = pneg %p135
        %p241 = pneg %p132
        %s242 = sand.u32 %s122, 1
        %s243 = scalar_lea.sflag [#allocation5], %s242
        %s244 = sand.u32 %s122, 1
        %s245 = smul.addr %s244, 128
        %s246 = scalar_lea.vmem [#allocation9], %s245
        %s247 = smul.u32 4, %s27
        %s248 = smul.u32 16, %s27
        %p250 = scmp.eq.s32.totalorder %s28, 0
        // Predicated region
        $region45: #{tpu_custom_call.1} parent=31 // pred_check
          %p251 = pneg %p250
        $region46: #{tpu_custom_call.1} parent=31 // pred_check_branch
          %253 = sbr.rel (%p251) target = $region48
        $region47: #{tpu_custom_call.1} parent=31 // pred_region
          %254 = vst [vmem:[#allocation2] sm:$0xff] 0.0
          %255 = vst [vmem:[#allocation2 + $0x8] sm:$0xff] 0.0
          %256 = vst [vmem:[#allocation2 + $0x10] sm:$0xff] 0.0
          %257 = vst [vmem:[#allocation2 + $0x18] sm:$0xff] 0.0
          %258 = vst [vmem:[#allocation2 + $0x20] sm:$0xff] 0.0
          %259 = vst [vmem:[#allocation2 + $0x28] sm:$0xff] 0.0
          %260 = vst [vmem:[#allocation2 + $0x30] sm:$0xff] 0.0
          %261 = vst [vmem:[#allocation2 + $0x38] sm:$0xff] 0.0
          %262 = vst [vmem:[#allocation2 + $0x40] sm:$0xff] 0.0
          %263 = vst [vmem:[#allocation2 + $0x48] sm:$0xff] 0.0
          %264 = vst [vmem:[#allocation2 + $0x50] sm:$0xff] 0.0
          %265 = vst [vmem:[#allocation2 + $0x58] sm:$0xff] 0.0
          %266 = vst [vmem:[#allocation2 + $0x60] sm:$0xff] 0.0
          %267 = vst [vmem:[#allocation2 + $0x68] sm:$0xff] 0.0
          %268 = vst [vmem:[#allocation2 + $0x70] sm:$0xff] 0.0
          %269 = vst [vmem:[#allocation2 + $0x78] sm:$0xff] 0.0
        $region48: #{tpu_custom_call.1} parent=31 // pred_fallthru
          _
        %v270 = vld [vmem:[%s216] sm:$0xff]
        %v271 = vld [vmem:[%s216 + $0x8] sm:$0xff]
        %v272 = vld [vmem:[%s216 + $0x10] sm:$0xff]
        %v273 = vld [vmem:[%s216 + $0x18] sm:$0xff]
        %v274 = vunpack.c.l.s8.bf16 %v270
        %v275 = vunpack.c.h.s8.bf16 %v270
        %v276 = vunpack.c.l.s8.bf16 %v271
        %v277 = vunpack.c.h.s8.bf16 %v271
        %v278 = vunpack.c.l.s8.bf16 %v272
        %v279 = vunpack.c.h.s8.bf16 %v272
        %v280 = vunpack.c.l.s8.bf16 %v273
        %v281 = vunpack.c.h.s8.bf16 %v273
        %s282 = smul.u32 %s28, 128
        %s283 = sshra.s32 %s282, 3
        %s284 = sand.u32 %s282, 7
        %s285 = smul.addr %s283, 4
        %s286 = scalar_lea.vmem [#allocation6], %s285
        %v287 = vld [vmem:[%s286] sm:$0xf]
        %v288 = vld [vmem:[%s286 + $0x4] sm:$0xf]
        %v289 = vld [vmem:[%s286 + $0x8] sm:$0xf]
        %v290 = vld [vmem:[%s286 + $0xc] sm:$0xf]
        %v291 = vld [vmem:[%s286 + $0x10] sm:$0xf]
        %v292 = vld [vmem:[%s286 + $0x14] sm:$0xf]
        %v293 = vld [vmem:[%s286 + $0x18] sm:$0xf]
        %v294 = vld [vmem:[%s286 + $0x1c] sm:$0xf]
        %v295 = vld [vmem:[%s286 + $0x20] sm:$0xf]
        %v296 = vld [vmem:[%s286 + $0x24] sm:$0xf]
        %v297 = vld [vmem:[%s286 + $0x28] sm:$0xf]
        %v298 = vld [vmem:[%s286 + $0x2c] sm:$0xf]
        %v299 = vld [vmem:[%s286 + $0x30] sm:$0xf]
        %v300 = vld [vmem:[%s286 + $0x34] sm:$0xf]
        %v301 = vld [vmem:[%s286 + $0x38] sm:$0xf]
        %v302 = vld [vmem:[%s286 + $0x3c] sm:$0xf]
        %s303 = smul.addr %s283, 4
        %s304 = scalar_lea.vmem [#allocation8], %s303
        %v305 = vld [vmem:[%s304] sm:$0xf]
        %v306 = vld [vmem:[%s304 + $0x4] sm:$0xf]
        %v307 = vld [vmem:[%s304 + $0x8] sm:$0xf]
        %v308 = vld [vmem:[%s304 + $0xc] sm:$0xf]
        %v309 = vld [vmem:[%s304 + $0x10] sm:$0xf]
        %v310 = vld [vmem:[%s304 + $0x14] sm:$0xf]
        %v311 = vld [vmem:[%s304 + $0x18] sm:$0xf]
        %v312 = vld [vmem:[%s304 + $0x1c] sm:$0xf]
        %v313 = vld [vmem:[%s304 + $0x20] sm:$0xf]
        %v314 = vld [vmem:[%s304 + $0x24] sm:$0xf]
        %v315 = vld [vmem:[%s304 + $0x28] sm:$0xf]
        %v316 = vld [vmem:[%s304 + $0x2c] sm:$0xf]
        %v317 = vld [vmem:[%s304 + $0x30] sm:$0xf]
        %v318 = vld [vmem:[%s304 + $0x34] sm:$0xf]
        %v319 = vld [vmem:[%s304 + $0x38] sm:$0xf]
        %v320 = vld [vmem:[%s304 + $0x3c] sm:$0xf]
        %v321 = vld [vmem:[#allocation2] sm:$0xff]
        %v322 = vld [vmem:[#allocation2 + $0x8] sm:$0xff]
        %v323 = vld [vmem:[#allocation2 + $0x10] sm:$0xff]
        %v324 = vld [vmem:[#allocation2 + $0x18] sm:$0xff]
        %v325 = vld [vmem:[#allocation2 + $0x20] sm:$0xff]
        %v326 = vld [vmem:[#allocation2 + $0x28] sm:$0xff]
        %v327 = vld [vmem:[#allocation2 + $0x30] sm:$0xff]
        %v328 = vld [vmem:[#allocation2 + $0x38] sm:$0xff]
        %v329 = vld [vmem:[#allocation2 + $0x40] sm:$0xff]
        %v330 = vld [vmem:[#allocation2 + $0x48] sm:$0xff]
        %v331 = vld [vmem:[#allocation2 + $0x50] sm:$0xff]
        %v332 = vld [vmem:[#allocation2 + $0x58] sm:$0xff]
        %v333 = vld [vmem:[#allocation2 + $0x60] sm:$0xff]
        %v334 = vld [vmem:[#allocation2 + $0x68] sm:$0xff]
        %v335 = vld [vmem:[#allocation2 + $0x70] sm:$0xff]
        %v336 = vld [vmem:[#allocation2 + $0x78] sm:$0xff]
        %v353 = vunpack.c.l.b16 %v305
        %v354 = vunpack.c.l.b16 %v306
        %v355 = vunpack.c.l.b16 %v307
        %v356 = vunpack.c.l.b16 %v308
        %v357 = vunpack.c.l.b16 %v309
        %v358 = vunpack.c.l.b16 %v310
        %v359 = vunpack.c.l.b16 %v311
        %v360 = vunpack.c.l.b16 %v312
        %v361 = vunpack.c.l.b16 %v313
        %v362 = vunpack.c.l.b16 %v314
        %v363 = vunpack.c.l.b16 %v315
        %v364 = vunpack.c.l.b16 %v316
        %v365 = vunpack.c.l.b16 %v317
        %v366 = vunpack.c.l.b16 %v318
        %v367 = vunpack.c.l.b16 %v319
        %v368 = vunpack.c.l.b16 %v320
        %v369 = vpack.c.b16 %v354, %v353
        %v370 = vpack.c.b16 %v356, %v355
        %v371 = vpack.c.b16 %v358, %v357
        %v372 = vpack.c.b16 %v360, %v359
        %v373 = vpack.c.b16 %v362, %v361
        %v374 = vpack.c.b16 %v364, %v363
        %v375 = vpack.c.b16 %v366, %v365
        %v376 = vpack.c.b16 %v368, %v367
        %385 = vmatprep.subr.bf16.mxu0 0
        %386 = vmatpush1.bf16.msra.mxu0 %v376
        %387 = vmatprep.subr.bf16.mxu0 0
        %388 = vmatpush1.bf16.msra.mxu0 %v375
        %389 = vmatprep.subr.bf16.mxu0 0
        %390 = vmatpush1.bf16.msra.mxu0 %v374
        %391 = vmatprep.subr.bf16.mxu0 0
        %392 = vmatpush1.bf16.msra.mxu0 %v373
        %393 = vmatprep.subr.bf16.mxu0 0
        %394 = vmatpush1.bf16.msra.mxu0 %v372
        %395 = vmatprep.subr.bf16.mxu0 0
        %396 = vmatpush1.bf16.msra.mxu0 %v371
        %397 = vmatprep.subr.bf16.mxu0 0
        %398 = vmatpush1.bf16.msra.mxu0 %v370
        %399 = vmatprep.subr.bf16.mxu0 0
        %400 = vmatpush1.bf16.msra.mxu0 %v369
        %401 = vmatprep.subr.bf16.mxu0 0
        %402 = vmatpush2.bf16.msra.mxu0 0
        %403 = vmatprep.subr.bf16.mxu0 0
        %404 = vmatpush2.bf16.msra.mxu0 0
        %405 = vmatprep.subr.bf16.mxu0 0
        %406 = vmatpush2.bf16.msra.mxu0 0
        %407 = vmatprep.subr.bf16.mxu0 0
        %408 = vmatpush2.bf16.msra.mxu0 0
        %409 = vmatprep.subr.bf16.mxu0 0
        %410 = vmatpush2.bf16.msra.mxu0 0
        %411 = vmatprep.subr.bf16.mxu0 0
        %412 = vmatpush2.bf16.msra.mxu0 0
        %413 = vmatprep.subr.bf16.mxu0 0
        %414 = vmatpush2.bf16.msra.mxu0 0
        %415 = vmatprep.subr.bf16.mxu0 0
        %416 = vmatpush2.bf16.msra.mxu0 0
        %417 = vmatprep.mubr.bf16.mxu0 0
        %418 = vmatmul.mubr.bf16.gmra.mxu0 %v274
        %v419 = vpop.f32.mrf.mxu0
        %v420 = vadd.f32 0.0, %v419
        %v421 = vpop.f32.mrf.mxu0
        %v422 = vpop.f32.mrf.mxu0
        %v423 = vadd.f32 0.0, %v422
        %v424 = vpop.f32.mrf.mxu0
        %425 = vmatprep.mubr.bf16.mxu0 0
        %426 = vmatmul.mubr.bf16.gmra.mxu0 %v275
        %v427 = vpop.f32.mrf.mxu0
        %v428 = vadd.f32 0.0, %v427
        %v429 = vpop.f32.mrf.mxu0
        %v430 = vpop.f32.mrf.mxu0
        %v431 = vadd.f32 0.0, %v430
        %v432 = vpop.f32.mrf.mxu0
        %433 = vmatprep.mubr.bf16.mxu0 0
        %434 = vmatmul.mubr.bf16.gmra.mxu0 %v276
        %v435 = vpop.f32.mrf.mxu0
        %v436 = vadd.f32 0.0, %v435
        %v437 = vpop.f32.mrf.mxu0
        %v438 = vpop.f32.mrf.mxu0
        %v439 = vadd.f32 0.0, %v438
        %v440 = vpop.f32.mrf.mxu0
        %441 = vmatprep.mubr.bf16.mxu0 0
        %442 = vmatmul.mubr.bf16.gmra.mxu0 %v277
        %v443 = vpop.f32.mrf.mxu0
        %v444 = vadd.f32 0.0, %v443
        %v445 = vpop.f32.mrf.mxu0
        %v446 = vpop.f32.mrf.mxu0
        %v447 = vadd.f32 0.0, %v446
        %v448 = vpop.f32.mrf.mxu0
        %449 = vmatprep.mubr.bf16.mxu0 0
        %450 = vmatmul.mubr.bf16.gmra.mxu0 %v278
        %v451 = vpop.f32.mrf.mxu0
        %v452 = vadd.f32 0.0, %v451
        %v453 = vpop.f32.mrf.mxu0
        %v454 = vpop.f32.mrf.mxu0
        %v455 = vadd.f32 0.0, %v454
        %v456 = vpop.f32.mrf.mxu0
        %457 = vmatprep.mubr.bf16.mxu0 0
        %458 = vmatmul.mubr.bf16.gmra.mxu0 %v279
        %v459 = vpop.f32.mrf.mxu0
        %v460 = vadd.f32 0.0, %v459
        %v461 = vpop.f32.mrf.mxu0
        %v462 = vpop.f32.mrf.mxu0
        %v463 = vadd.f32 0.0, %v462
        %v464 = vpop.f32.mrf.mxu0
        %465 = vmatprep.mubr.bf16.mxu0 0
        %466 = vmatmul.mubr.bf16.gmra.mxu0 %v280
        %v467 = vpop.f32.mrf.mxu0
        %v468 = vadd.f32 0.0, %v467
        %v469 = vpop.f32.mrf.mxu0
        %v470 = vpop.f32.mrf.mxu0
        %v471 = vadd.f32 0.0, %v470
        %v472 = vpop.f32.mrf.mxu0
        %473 = vmatprep.mubr.bf16.mxu0 0
        %474 = vmatmul.mubr.bf16.gmra.mxu0 %v281
        %v475 = vpop.f32.mrf.mxu0
        %v476 = vadd.f32 0.0, %v475
        %v477 = vpop.f32.mrf.mxu0
        %v478 = vpop.f32.mrf.mxu0
        %v479 = vadd.f32 0.0, %v478
        %v480 = vpop.f32.mrf.mxu0
        %481 = vdwg.mxu0
        %v498 = vunpack.c.l.b16 %v287
        %v499 = vunpack.c.l.b16 %v288
        %v500 = vunpack.c.l.b16 %v289
        %v501 = vunpack.c.l.b16 %v290
        %v502 = vunpack.c.l.b16 %v291
        %v503 = vunpack.c.l.b16 %v292
        %v504 = vunpack.c.l.b16 %v293
        %v505 = vunpack.c.l.b16 %v294
        %v506 = vunpack.c.l.b16 %v295
        %v507 = vunpack.c.l.b16 %v296
        %v508 = vunpack.c.l.b16 %v297
        %v509 = vunpack.c.l.b16 %v298
        %v510 = vunpack.c.l.b16 %v299
        %v511 = vunpack.c.l.b16 %v300
        %v512 = vunpack.c.l.b16 %v301
        %v513 = vunpack.c.l.b16 %v302
        %v514 = vpack.c.b16 %v499, %v498
        %v515 = vpack.c.b16 %v501, %v500
        %v516 = vpack.c.b16 %v503, %v502
        %v517 = vpack.c.b16 %v505, %v504
        %v518 = vpack.c.b16 %v507, %v506
        %v519 = vpack.c.b16 %v509, %v508
        %v520 = vpack.c.b16 %v511, %v510
        %v521 = vpack.c.b16 %v513, %v512
        %530 = vmatprep.subr.bf16.mxu0 0
        %531 = vmatpush1.bf16.msra.mxu0 %v521
        %532 = vmatprep.subr.bf16.mxu0 0
        %533 = vmatpush1.bf16.msra.mxu0 %v520
        %534 = vmatprep.subr.bf16.mxu0 0
        %535 = vmatpush1.bf16.msra.mxu0 %v519
        %536 = vmatprep.subr.bf16.mxu0 0
        %537 = vmatpush1.bf16.msra.mxu0 %v518
        %538 = vmatprep.subr.bf16.mxu0 0
        %539 = vmatpush1.bf16.msra.mxu0 %v517
        %540 = vmatprep.subr.bf16.mxu0 0
        %541 = vmatpush1.bf16.msra.mxu0 %v516
        %542 = vmatprep.subr.bf16.mxu0 0
        %543 = vmatpush1.bf16.msra.mxu0 %v515
        %544 = vmatprep.subr.bf16.mxu0 0
        %545 = vmatpush1.bf16.msra.mxu0 %v514
        %546 = vmatprep.subr.bf16.mxu0 0
        %547 = vmatpush2.bf16.msra.mxu0 0
        %548 = vmatprep.subr.bf16.mxu0 0
        %549 = vmatpush2.bf16.msra.mxu0 0
        %550 = vmatprep.subr.bf16.mxu0 0
        %551 = vmatpush2.bf16.msra.mxu0 0
        %552 = vmatprep.subr.bf16.mxu0 0
        %553 = vmatpush2.bf16.msra.mxu0 0
        %554 = vmatprep.subr.bf16.mxu0 0
        %555 = vmatpush2.bf16.msra.mxu0 0
        %556 = vmatprep.subr.bf16.mxu0 0
        %557 = vmatpush2.bf16.msra.mxu0 0
        %558 = vmatprep.subr.bf16.mxu0 0
        %559 = vmatpush2.bf16.msra.mxu0 0
        %560 = vmatprep.subr.bf16.mxu0 0
        %561 = vmatpush2.bf16.msra.mxu0 0
        %562 = vmatprep.mubr.bf16.mxu0 0
        %563 = vmatmul.mubr.bf16.gmra.mxu0 %v274
        %v564 = vpop.f32.mrf.mxu0
        %v565 = vadd.f32 %v420, %v564
        %v566 = vpop.f32.mrf.mxu0
        %v567 = vpop.f32.mrf.mxu0
        %v568 = vadd.f32 %v423, %v567
        %v569 = vpop.f32.mrf.mxu0
        %570 = vmatprep.mubr.bf16.mxu0 0
        %571 = vmatmul.mubr.bf16.gmra.mxu0 %v275
        %v572 = vpop.f32.mrf.mxu0
        %v573 = vadd.f32 %v428, %v572
        %v574 = vpop.f32.mrf.mxu0
        %v575 = vpop.f32.mrf.mxu0
        %v576 = vadd.f32 %v431, %v575
        %v577 = vpop.f32.mrf.mxu0
        %578 = vmatprep.mubr.bf16.mxu0 0
        %579 = vmatmul.mubr.bf16.gmra.mxu0 %v276
        %v580 = vpop.f32.mrf.mxu0
        %v581 = vadd.f32 %v436, %v580
        %v582 = vpop.f32.mrf.mxu0
        %v583 = vpop.f32.mrf.mxu0
        %v584 = vadd.f32 %v439, %v583
        %v585 = vpop.f32.mrf.mxu0
        %586 = vmatprep.mubr.bf16.mxu0 0
        %587 = vmatmul.mubr.bf16.gmra.mxu0 %v277
        %v588 = vpop.f32.mrf.mxu0
        %v589 = vadd.f32 %v444, %v588
        %v590 = vpop.f32.mrf.mxu0
        %v591 = vpop.f32.mrf.mxu0
        %v592 = vadd.f32 %v447, %v591
        %v593 = vpop.f32.mrf.mxu0
        %594 = vmatprep.mubr.bf16.mxu0 0
        %595 = vmatmul.mubr.bf16.gmra.mxu0 %v278
        %v596 = vpop.f32.mrf.mxu0
        %v597 = vadd.f32 %v452, %v596
        %v598 = vpop.f32.mrf.mxu0
        %v599 = vpop.f32.mrf.mxu0
        %v600 = vadd.f32 %v455, %v599
        %v601 = vpop.f32.mrf.mxu0
        %602 = vmatprep.mubr.bf16.mxu0 0
        %603 = vmatmul.mubr.bf16.gmra.mxu0 %v279
        %v604 = vpop.f32.mrf.mxu0
        %v605 = vadd.f32 %v460, %v604
        %v606 = vpop.f32.mrf.mxu0
        %v607 = vpop.f32.mrf.mxu0
        %v608 = vadd.f32 %v463, %v607
        %v609 = vpop.f32.mrf.mxu0
        %610 = vmatprep.mubr.bf16.mxu0 0
        %611 = vmatmul.mubr.bf16.gmra.mxu0 %v280
        %v612 = vpop.f32.mrf.mxu0
        %v613 = vadd.f32 %v468, %v612
        %v614 = vpop.f32.mrf.mxu0
        %v615 = vpop.f32.mrf.mxu0
        %v616 = vadd.f32 %v471, %v615
        %v617 = vpop.f32.mrf.mxu0
        %618 = vmatprep.mubr.bf16.mxu0 0
        %619 = vmatmul.mubr.bf16.gmra.mxu0 %v281
        %v620 = vpop.f32.mrf.mxu0
        %v621 = vadd.f32 %v476, %v620
        %v622 = vpop.f32.mrf.mxu0
        %v623 = vpop.f32.mrf.mxu0
        %v624 = vadd.f32 %v479, %v623
        %v625 = vpop.f32.mrf.mxu0
        %626 = vdwg.mxu0
        %v627 = vadd.f32 %v321, %v565
        %v628 = vadd.f32 %v322, %v568
        %v629 = vadd.f32 %v323, %v573
        %v630 = vadd.f32 %v324, %v576
        %v631 = vadd.f32 %v325, %v581
        %v632 = vadd.f32 %v326, %v584
        %v633 = vadd.f32 %v327, %v589
        %v634 = vadd.f32 %v328, %v592
        %v635 = vadd.f32 %v329, %v597
        %v636 = vadd.f32 %v330, %v600
        %v637 = vadd.f32 %v331, %v605
        %v638 = vadd.f32 %v332, %v608
        %v639 = vadd.f32 %v333, %v613
        %v640 = vadd.f32 %v334, %v616
        %v641 = vadd.f32 %v335, %v621
        %v642 = vadd.f32 %v336, %v624
        %643 = vst [vmem:[#allocation2] sm:$0xff] %v627
        %644 = vst [vmem:[#allocation2 + $0x8] sm:$0xff] %v628
        %645 = vst [vmem:[#allocation2 + $0x10] sm:$0xff] %v629
        %646 = vst [vmem:[#allocation2 + $0x18] sm:$0xff] %v630
        %647 = vst [vmem:[#allocation2 + $0x20] sm:$0xff] %v631
        %648 = vst [vmem:[#allocation2 + $0x28] sm:$0xff] %v632
        %649 = vst [vmem:[#allocation2 + $0x30] sm:$0xff] %v633
        %650 = vst [vmem:[#allocation2 + $0x38] sm:$0xff] %v634
        %651 = vst [vmem:[#allocation2 + $0x40] sm:$0xff] %v635
        %652 = vst [vmem:[#allocation2 + $0x48] sm:$0xff] %v636
        %653 = vst [vmem:[#allocation2 + $0x50] sm:$0xff] %v637
        %654 = vst [vmem:[#allocation2 + $0x58] sm:$0xff] %v638
        %655 = vst [vmem:[#allocation2 + $0x60] sm:$0xff] %v639
        %656 = vst [vmem:[#allocation2 + $0x68] sm:$0xff] %v640
        %657 = vst [vmem:[#allocation2 + $0x70] sm:$0xff] %v641
        %658 = vst [vmem:[#allocation2 + $0x78] sm:$0xff] %v642
        %p659 = scmp.eq.s32.totalorder %s28, 2
        // Predicated region
        $region49: #{tpu_custom_call.1} parent=31 // pred_check
          %p660 = pneg %p659
        $region50: #{tpu_custom_call.1} parent=31 // pred_check_branch
          %662 = sbr.rel (%p660) target = $region52
        $region51: #{tpu_custom_call.1} parent=31 // pred_region
          %v663 = vld [vmem:[#allocation2] sm:$0xff]
          %v664 = vld [vmem:[#allocation2 + $0x8] sm:$0xff]
          %v665 = vld [vmem:[#allocation2 + $0x10] sm:$0xff]
          %v666 = vld [vmem:[#allocation2 + $0x18] sm:$0xff]
          %v667 = vld [vmem:[#allocation2 + $0x20] sm:$0xff]
          %v668 = vld [vmem:[#allocation2 + $0x28] sm:$0xff]
          %v669 = vld [vmem:[#allocation2 + $0x30] sm:$0xff]
          %v670 = vld [vmem:[#allocation2 + $0x38] sm:$0xff]
          %v671 = vld [vmem:[#allocation2 + $0x40] sm:$0xff]
          %v672 = vld [vmem:[#allocation2 + $0x48] sm:$0xff]
          %v673 = vld [vmem:[#allocation2 + $0x50] sm:$0xff]
          %v674 = vld [vmem:[#allocation2 + $0x58] sm:$0xff]
          %v675 = vld [vmem:[#allocation2 + $0x60] sm:$0xff]
          %v676 = vld [vmem:[#allocation2 + $0x68] sm:$0xff]
          %v677 = vld [vmem:[#allocation2 + $0x70] sm:$0xff]
          %v678 = vld [vmem:[#allocation2 + $0x78] sm:$0xff]
          %679 = vst [vmem:[%s246] sm:$0xff] %v663
          %680 = vst [vmem:[%s246 + $0x8] sm:$0xff] %v664
          %681 = vst [vmem:[%s246 + $0x10] sm:$0xff] %v665
          %682 = vst [vmem:[%s246 + $0x18] sm:$0xff] %v666
          %683 = vst [vmem:[%s246 + $0x20] sm:$0xff] %v667
          %684 = vst [vmem:[%s246 + $0x28] sm:$0xff] %v668
          %685 = vst [vmem:[%s246 + $0x30] sm:$0xff] %v669
          %686 = vst [vmem:[%s246 + $0x38] sm:$0xff] %v670
          %687 = vst [vmem:[%s246 + $0x40] sm:$0xff] %v671
          %688 = vst [vmem:[%s246 + $0x48] sm:$0xff] %v672
          %689 = vst [vmem:[%s246 + $0x50] sm:$0xff] %v673
          %690 = vst [vmem:[%s246 + $0x58] sm:$0xff] %v674
          %691 = vst [vmem:[%s246 + $0x60] sm:$0xff] %v675
          %692 = vst [vmem:[%s246 + $0x68] sm:$0xff] %v676
          %693 = vst [vmem:[%s246 + $0x70] sm:$0xff] %v677
          %694 = vst [vmem:[%s246 + $0x78] sm:$0xff] %v678
        $region52: #{tpu_custom_call.1} parent=31 // pred_fallthru
          _
        %s695 = sand.u32 %s122, 1
        %s696 = scalar_lea.sflag [#allocation5], %s695
        %s697 = sand.u32 %s122, 1
        %s698 = smul.addr %s697, 128
        %s699 = scalar_lea.vmem [#allocation9], %s698
        // Predicated region
        $region53: #{tpu_custom_call.1} parent=31 // pred_check
          %p700 = pneg %p132
        $region54: #{tpu_custom_call.1} parent=31 // pred_check_branch
          %702 = sbr.rel (%p700) target = $region56
        $region55: #{tpu_custom_call.1} parent=31 // pred_region
          %s703 = smul.u32 16, %s27
          %s705 = ssub.s32 2048, 2048
          %706 = vsyncadd %s696, %s705
          %s707 = smul.addr %s703, 3
          %s708 = sadd.s32 %s26, %s707
          %s709 = smul.addr %s708, 128
          %s710 = scalar_lea.hbm %s3, %s709
          %s711 = sshll.u32 %s699, 4
          %s712 = int_to_ptr.vmem [resolvable:$true] %s711
          %717 = dma.vmem_to_hbm [thread:$0]  %s712, 2048, %s710, %s696, 128, 384, 8
        $region56: #{tpu_custom_call.1} parent=31 // pred_fallthru
          _
      $region32: #{tpu_custom_call.1} parent=5 // pred_fallthru
        _
      %p718 = scmp.le.s32.totalorder 2, %s16
      // Predicated region
      $region57: #{tpu_custom_call.1} parent=5 // pred_check
        %p719 = pneg %p718
      $region58: #{tpu_custom_call.1} parent=5 // pred_check_branch
        %721 = sbr.rel (%p719) target = $region60
      $region59: #{tpu_custom_call.1} parent=5 // pred_region
        %s722 = ssub.s32 %s16, 2
        // Predicated region
        $region61: #{tpu_custom_call.1} parent=59 // pred_check
          %p723 = pneg %p138
        $region62: #{tpu_custom_call.1} parent=59 // pred_check_branch
          %725 = sbr.rel (%p723) target = $region64
        $region63: #{tpu_custom_call.1} parent=59 // pred_region
          %s726 = sand.u32 %s123, 1
          %s727 = scalar_lea.sflag [#allocation5], %s726
          %s728 = sand.u32 %s123, 1
          %s729 = smul.addr %s728, 128
          %s730 = scalar_lea.vmem [#allocation9], %s729
          %731 = dma.done %s727, 2048
        $region64: #{tpu_custom_call.1} parent=59 // pred_fallthru
          _
      $region60: #{tpu_custom_call.1} parent=5 // pred_fallthru
        _
    $region6: #{tpu_custom_call.1} parent=1 // loop_footer
      %s20 = sadd.s32 1, %s16
    $region7: #{tpu_custom_call.1} parent=1 // loop_footer_branch
      %15 = sbr.rel target = $region3
    $region8: #{tpu_custom_call.1} parent=1 // loop_exit
      _
    %732 = vsyncpa [#allocation4], 1
    %s733 = scalar_lea.sflag [#allocation4], 1
    %734 = vsyncpa %s733, 1
    %735 = vsyncpa [#allocation7], 1
    %736 = vsyncpa [#allocation5], 1
    %s737 = scalar_lea.sflag [#allocation5], 1
    %738 = vsyncpa %s737, 1

</llo_original>
